<compile_context>
chip_gen: v7x
topology: tpu7x:2x2x1
jax: 0.10.0
libtpu: 0.0.40
codegen_flags: <defaults>
</compile_context>

<pallas_src>
import functools

import jax
import jax.numpy as jnp
from jax import lax
from jax.experimental import pallas as pl
from jax.experimental.pallas import tpu as pltpu


def _round_up(x, m):
    return ((x + m - 1) // m) * m


def _embed_kernel(rows_ref, table_ref, out_ref, *, tile_b, precision):
    """Gather tile_b rows of the VMEM-resident table via a one-hot MXU matmul.

    rows_ref:  (b_pad, 1) int32   resident effective row indices (all tiles)
    table_ref: (V_pad, H)         resident, zero-padded embedding table
    out_ref:   (tile_b, H)        dense output tile for this grid step
    """
    t = pl.program_id(0)
    start = pl.multiple_of(t * tile_b, 8)
    rows = rows_ref[pl.ds(start, tile_b), :]                     # (TB, 1)
    v_pad = table_ref.shape[0]
    col_ids = lax.broadcasted_iota(jnp.int32, (tile_b, v_pad), 1)  # (TB, Vp)
    one_hot = (rows == col_ids).astype(table_ref.dtype)           # exact 0/1
    out_ref[...] = jnp.dot(
        one_hot, table_ref[...],
        preferred_element_type=jnp.float32,
        precision=precision).astype(out_ref.dtype)


def label_embedder_forward(labels, table, *, num_classes, dropout_prob,
                           train, force_drop_ids=None, rng=None, tile_b=None):
    """Pallas implementation of LabelEmbedder.forward.

    labels: (B,) int  -- class ids in [0, num_classes)
    table:  (V, H)    -- V = num_classes + (dropout_prob > 0)
    returns (B, H) embeddings (same dtype as table).
    """
    B = labels.shape[0]
    V, H = table.shape
    labels = labels.astype(jnp.int32)

    use_dropout = dropout_prob > 0
    if force_drop_ids is not None and not use_dropout:
        raise ValueError(
            "force_drop_ids requires dropout_prob > 0: the table has no "
            "classifier-free-guidance row to drop to.")

    # token_drop: labels = where(drop, num_classes, labels)
    if (train and use_dropout) or (force_drop_ids is not None):
        if force_drop_ids is None:
            assert rng is not None, "rng key required for random token drop"
            drop = jax.random.uniform(rng, (B,)) < dropout_prob
        else:
            drop = (force_drop_ids == 1)
        eff_rows = jnp.where(drop, num_classes, labels).astype(jnp.int32)
    else:
        eff_rows = labels

    itemsize = jnp.dtype(table.dtype).itemsize
    # Sublane packing unit for the output dtype: 8 f32, 16 bf16, 32 int8/fp8.
    sub = {4: 8, 2: 16, 1: 32}.get(itemsize, 8)

    # --- Batch tiling --------------------------------------------------------
    if tile_b is None:
        if B >= 1024:
            tile_b = 512            # multiple of 256, >=2 grid steps
        elif B >= 512:
            tile_b = 256            # fills 256-wide MXU M dim, >=2 steps
        else:
            # Moderate/small B: aim for 2 grid steps (v7x dual TC) without
            # dropping below the sublane packing unit.
            target = (B + 1) // 2 if B > sub else B
            tile_b = max(sub, _round_up(target, sub))
    if tile_b % sub != 0:
        raise ValueError(f"tile_b={tile_b} must be a multiple of {sub} for "
                         f"dtype {table.dtype}")

    num_tiles = pl.cdiv(B, tile_b)
    b_pad = num_tiles * tile_b
    if b_pad != B:
        eff_rows = jnp.concatenate(
            [eff_rows, jnp.zeros((b_pad - B,), jnp.int32)])
    eff_rows = eff_rows.reshape(b_pad, 1)

    # --- Pad V to a multiple of 256 with zero rows (MXU K alignment) --------
    V_pad = _round_up(V, 256)
    if V_pad != V:
        table_p = jnp.concatenate(
            [table, jnp.zeros((V_pad - V, H), table.dtype)], axis=0)
    else:
        table_p = table

    # Exact-gather insurance for f32 tables (avoid single bf16 MXU pass).
    precision = (lax.Precision.HIGHEST
                 if table.dtype == jnp.float32 else None)

    kernel = functools.partial(_embed_kernel, tile_b=tile_b,
                               precision=precision)

    # --- VMEM budget / compiler params ---------------------------------------
    est_vmem = (V_pad * H * itemsize            # resident table, Buffered(1)
                + b_pad * 4                     # resident row indices
                + 2 * tile_b * H * itemsize     # double-buffered output tile
                + tile_b * V_pad * itemsize     # one-hot temporary
                + tile_b * H * 4)               # f32 accumulator
    vmem_limit = None
    if est_vmem > 12 * 1024 * 1024:
        vmem_limit = min(2 * est_vmem, 48 * 1024 * 1024)

    cost = pl.CostEstimate(
        flops=2 * b_pad * V_pad * H,
        transcendentals=0,
        bytes_accessed=(V_pad * H * itemsize     # table read
                        + b_pad * H * itemsize   # output write
                        + b_pad * 4))            # row indices

    out = pl.pallas_call(
        kernel,
        out_shape=jax.ShapeDtypeStruct((b_pad, H), table.dtype),
        grid_spec=pltpu.PrefetchScalarGridSpec(
            num_scalar_prefetch=0,
            grid=(num_tiles,),
            in_specs=[
                # full row-index vector, resident across the grid, 1 buffer
                pl.BlockSpec((b_pad, 1), lambda t: (0, 0),
                             pipeline_mode=pl.Buffered(1)),
                # full (padded) table, resident across the grid, 1 buffer
                pl.BlockSpec((V_pad, H), lambda t: (0, 0),
                             pipeline_mode=pl.Buffered(1)),
            ],
            out_specs=pl.BlockSpec((tile_b, H), lambda t: (t, 0)),
        ),
        compiler_params=pltpu.CompilerParams(
            dimension_semantics=("parallel",),
            vmem_limit_bytes=vmem_limit),
        cost_estimate=cost,
    )(eff_rows, table_p)

    return out[:B]


def _reference(labels, table, num_classes, drop_ids):
    eff = jnp.where(drop_ids == 1, num_classes, labels)
    return table[eff]


if __name__ == "__main__":
    num_classes = 10
    hidden_size = 32
    dropout_prob = 0.1
    batch = 8
    V = num_classes + (1 if dropout_prob > 0 else 0)

    key = jax.random.PRNGKey(0)
    k_table, k_labels, k_drop, k_force = jax.random.split(key, 4)

    # nn.Embedding default init ~ N(0, 1), deterministic here.
    table = jax.random.normal(k_table, (V, hidden_size), dtype=jnp.float32)
    labels = jax.random.randint(k_labels, (batch,), 0, num_classes,
                                dtype=jnp.int32)

    # --- Path 1: eval (no dropout) ---
    out_eval = label_embedder_forward(
        labels, table, num_classes=num_classes, dropout_prob=dropout_prob,
        train=False)
    jax.block_until_ready(out_eval)
    ref_eval = _reference(labels, table, num_classes,
                          jnp.zeros((batch,), jnp.int32))
    assert jnp.allclose(out_eval, ref_eval, rtol=1e-6, atol=1e-7), \
        "eval path mismatch"

    # --- Path 2: deterministic forced drop (classifier-free guidance) ---
    force_drop_ids = jax.random.randint(k_force, (batch,), 0, 2,
                                        dtype=jnp.int32)
    out_forced = label_embedder_forward(
        labels, table, num_classes=num_classes, dropout_prob=dropout_prob,
        train=False, force_drop_ids=force_drop_ids)
    jax.block_until_ready(out_forced)
    ref_forced = _reference(labels, table, num_classes,
                            (force_drop_ids == 1).astype(jnp.int32))
    assert jnp.allclose(out_forced, ref_forced, rtol=1e-6, atol=1e-7), \
        "forced-drop path mismatch"

    # --- Path 3: train with random token drop (same rng used for reference) ---
    out_train = label_embedder_forward(
        labels, table, num_classes=num_classes, dropout_prob=dropout_prob,
        train=True, rng=k_drop)
    jax.block_until_ready(out_train)
    drop_ref_ids = (jax.random.uniform(k_drop, (batch,)) < dropout_prob
                    ).astype(jnp.int32)
    ref_train = _reference(labels, table, num_classes, drop_ref_ids)
    assert jnp.allclose(out_train, ref_train, rtol=1e-6, atol=1e-7), \
        "train/random-drop path mismatch"

    # --- Path 4: bf16 table (exact by one-hot gather), exercises packing path
    table_bf16 = table.astype(jnp.bfloat16)
    out_bf16 = label_embedder_forward(
        labels, table_bf16, num_classes=num_classes, dropout_prob=dropout_prob,
        train=False)
    jax.block_until_ready(out_bf16)
    assert jnp.array_equal(out_bf16, table_bf16[labels]), "bf16 path mismatch"

    print("KERNEL_OK")
</pallas_src>

<mosaic_0001>
module attributes {stable_mosaic.version = 11 : i64} {
  func.func @_embed_kernel(%arg0: i32, %arg1: memref<8x1xi32, #tpu.memory_space<vmem>>, %arg2: memref<256x32xf32, #tpu.memory_space<vmem>>, %arg3: memref<8x32xf32, #tpu.memory_space<vmem>>) attributes {dimension_semantics = [#tpu.dimension_semantics<parallel>], iteration_bounds = array<i64: 1>, scalar_prefetch = 0 : i64, scratch_operands = 0 : i64, tpu.core_type = #tpu.core_type<tc>, window_params = [{pipeline_mode = #tpu.pipeline_mode<synchronous>, transform_indices = @transform_0, window_bounds = array<i64: 8, 1>}, {pipeline_mode = #tpu.pipeline_mode<synchronous>, transform_indices = @transform_1, window_bounds = array<i64: 256, 32>}, {transform_indices = @transform_2, window_bounds = array<i64: 8, 32>}]} {
    %c8_i32 = arith.constant 8 : i32
    %0 = arith.muli %arg0, %c8_i32 : i32
    %1 = tpu.assume_multiple %0, 8 : i32
    %2 = arith.index_cast %1 : i32 to index
    %c0 = arith.constant 0 : index
    %3 = vector.load %arg1[%2, %c0] : memref<8x1xi32, #tpu.memory_space<vmem>>, vector<8x1xi32>
    %4 = tpu.iota {dimensions = array<i32: 1>} : vector<8x256xi32>
    %5 = vector.broadcast %3 : vector<8x1xi32> to vector<8x256xi32>
    %6 = arith.cmpi eq, %5, %4 : vector<8x256xi32>
    %7 = arith.extui %6 : vector<8x256xi1> to vector<8x256xi32>
    %8 = arith.sitofp %7 : vector<8x256xi32> to vector<8x256xf32>
    %c0_0 = arith.constant 0 : index
    %c0_1 = arith.constant 0 : index
    %9 = vector.load %arg2[%c0_0, %c0_1] : memref<256x32xf32, #tpu.memory_space<vmem>>, vector<256x32xf32>
    %cst = arith.constant dense<0.000000e+00> : vector<8x32xf32>
    %10 = tpu.matmul %8, %9, %cst {dimension_numbers = #tpu.dot_dimension_numbers<[1], [0], [0], [1], [0, 0, 1, 1], [], []>, precision = #tpu.contract_precision<fp32>} : vector<8x256xf32>, vector<256x32xf32>, vector<8x32xf32> -> vector<8x32xf32>
    %c0_2 = arith.constant 0 : index
    %c0_3 = arith.constant 0 : index
    %11 = vector.load %arg3[%c0_2, %c0_3] : memref<8x32xf32, #tpu.memory_space<vmem>>, vector<8x32xf32>
    tpu.vector_store %arg3[%c0_2, %c0_3], %10 {strides = array<i32>} : memref<8x32xf32, #tpu.memory_space<vmem>>, vector<8x32xf32>,
    return
  }
  func.func @transform_0(%arg0: i32) -> (i32, i32) {
    %c0_i32 = arith.constant 0 : i32
    %c0_i32_0 = arith.constant 0 : i32
    %c0_i32_1 = arith.constant 0 : i32
    return %c0_i32, %c0_i32_0 : i32, i32
  }
  func.func @transform_1(%arg0: i32) -> (i32, i32) {
    %c0_i32 = arith.constant 0 : i32
    %c0_i32_0 = arith.constant 0 : i32
    %c0_i32_1 = arith.constant 0 : i32
    return %c0_i32, %c0_i32_0 : i32, i32
  }
  func.func @transform_2(%arg0: i32) -> (i32, i32) {
    %c0_i32 = arith.constant 0 : i32
    %c0_i32_0 = arith.constant 0 : i32
    return %arg0, %c0_i32 : i32, i32
  }
}

</mosaic_0001>

<llo_original>
// kernel: tpu_custom_call.1
$region0: #{tpu_custom_call.1}
  #allocation0 [shape = 'u32[]', space=smem, size = 0x4, offset = 0x4, fixed_abs, tag = 'smem constant byte address 0x4 - core index']
  #allocation1 [shape = 'u32[144,128]{1,0:T(1,128)}', space=vmem, size = 0x12000, scoped, tag = 'internal scratch']
  %s0 = inlined_call_operand.vmem [shape: s32[8,1], index: 0, kind: input, shape index: {}]
  %s1 = inlined_call_operand.vmem [shape: f32[256,32], index: 1, kind: input, shape index: {}]
  %s2 = inlined_call_operand.hbm [shape: f32[8,32], index: 2, kind: output, shape index: {}]
  %s3 = sld [smem:[#allocation0]]
  $region18: #{tpu_custom_call.1} parent=0
    _
  %s5 = ssub.s32 1, %s3
  %s6 = scalar_select 0, %s5, %s3
  $region1: #{tpu_custom_call.1} parent=0
    #allocation2 [shape = 'u8[4096]{0}', space=vmem, size = 0x1000, scoped, tag = 'output window, operand 0, single buffered']
    #allocation3 [shape = 's32[1]{0}', space=sflag, size = 0x4, scoped, tag = 'scoped memory for tpu_custom_call.1']
    %7 = vsyncpa [#allocation3], 0
    // Predicated region
    $region2: #{tpu_custom_call.1} parent=1 // pred_check
      _
    $region3: #{tpu_custom_call.1} parent=1 // pred_check_branch
      %9 = sbr.rel (0) target = $region5
    $region4: #{tpu_custom_call.1} parent=1 // pred_region
      _
    $region5: #{tpu_custom_call.1} parent=1 // pred_fallthru
      _
    // Predicated region
    $region6: #{tpu_custom_call.1} parent=1 // pred_check
      _
    $region7: #{tpu_custom_call.1} parent=1 // pred_check_branch
      %11 = sbr.rel (0) target = $region9
    $region8: #{tpu_custom_call.1} parent=1 // pred_region
      _
    $region9: #{tpu_custom_call.1} parent=1 // pred_fallthru
      _
    %s12 = smul.u32 0, 8
    %s13 = scalar_lea.vmem %s0, %s12
    %v14 = vld [vmem:[%s13] sm:$0xff]
    %v15 = vlaneseq
    %v16 = vand.u32 %v15, 127
    %v17 = vadd.s32 %v16, 128
    %18 = vset.pattern.permute.xlu0 0
    %19 = vperm.xlu0 %18, %v14
    %v20 = vpop.permute.xlu0 %19
    %vm21 = vcmp.eq.s32.totalorder %v20, %v16
    %vm22 = vcmp.eq.s32.totalorder %v20, %v17
    %v23 = vsel %vm21, 1, 0
    %v24 = vsel %vm22, 1, 0
    %v25 = vcvt.s32.f32 %v23
    %v26 = vcvt.s32.f32 %v24
    %v27 = vld [vmem:[%s1] sm:$0xff]
    %v28 = vld [vmem:[%s1 + $0x8] sm:$0xff]
    %v29 = vld [vmem:[%s1 + $0x10] sm:$0xff]
    %v30 = vld [vmem:[%s1 + $0x18] sm:$0xff]
    %v31 = vld [vmem:[%s1 + $0x20] sm:$0xff]
    %v32 = vld [vmem:[%s1 + $0x28] sm:$0xff]
    %v33 = vld [vmem:[%s1 + $0x30] sm:$0xff]
    %v34 = vld [vmem:[%s1 + $0x38] sm:$0xff]
    %v35 = vld [vmem:[%s1 + $0x40] sm:$0xff]
    %v36 = vld [vmem:[%s1 + $0x48] sm:$0xff]
    %v37 = vld [vmem:[%s1 + $0x50] sm:$0xff]
    %v38 = vld [vmem:[%s1 + $0x58] sm:$0xff]
    %v39 = vld [vmem:[%s1 + $0x60] sm:$0xff]
    %v40 = vld [vmem:[%s1 + $0x68] sm:$0xff]
    %v41 = vld [vmem:[%s1 + $0x70] sm:$0xff]
    %v42 = vld [vmem:[%s1 + $0x78] sm:$0xff]
    %v43 = vld [vmem:[%s1 + $0x80] sm:$0xff]
    %v44 = vld [vmem:[%s1 + $0x88] sm:$0xff]
    %v45 = vld [vmem:[%s1 + $0x90] sm:$0xff]
    %v46 = vld [vmem:[%s1 + $0x98] sm:$0xff]
    %v47 = vld [vmem:[%s1 + $0xa0] sm:$0xff]
    %v48 = vld [vmem:[%s1 + $0xa8] sm:$0xff]
    %v49 = vld [vmem:[%s1 + $0xb0] sm:$0xff]
    %v50 = vld [vmem:[%s1 + $0xb8] sm:$0xff]
    %v51 = vld [vmem:[%s1 + $0xc0] sm:$0xff]
    %v52 = vld [vmem:[%s1 + $0xc8] sm:$0xff]
    %v53 = vld [vmem:[%s1 + $0xd0] sm:$0xff]
    %v54 = vld [vmem:[%s1 + $0xd8] sm:$0xff]
    %v55 = vld [vmem:[%s1 + $0xe0] sm:$0xff]
    %v56 = vld [vmem:[%s1 + $0xe8] sm:$0xff]
    %v57 = vld [vmem:[%s1 + $0xf0] sm:$0xff]
    %v58 = vld [vmem:[%s1 + $0xf8] sm:$0xff]
    %59 = vmatprep.subr.mxu0 0.0
    %v60 = vand.u32 %v27, 4294901760
    %61 = vmatpush1.msra.mxu0 %v60
    %62 = vmatprep.subr.mxu0 0.0
    %v63 = vand.u32 %v28, 4294901760
    %64 = vmatpush1.msra.mxu0 %v63
    %65 = vmatprep.subr.mxu0 0.0
    %v66 = vand.u32 %v29, 4294901760
    %67 = vmatpush1.msra.mxu0 %v66
    %68 = vmatprep.subr.mxu0 0.0
    %v69 = vand.u32 %v30, 4294901760
    %70 = vmatpush1.msra.mxu0 %v69
    %71 = vmatprep.subr.mxu0 0.0
    %v72 = vand.u32 %v31, 4294901760
    %73 = vmatpush1.msra.mxu0 %v72
    %74 = vmatprep.subr.mxu0 0.0
    %v75 = vand.u32 %v32, 4294901760
    %76 = vmatpush1.msra.mxu0 %v75
    %77 = vmatprep.subr.mxu0 0.0
    %v78 = vand.u32 %v33, 4294901760
    %79 = vmatpush1.msra.mxu0 %v78
    %80 = vmatprep.subr.mxu0 0.0
    %v81 = vand.u32 %v34, 4294901760
    %82 = vmatpush1.msra.mxu0 %v81
    %83 = vmatprep.subr.mxu0 0.0
    %v84 = vand.u32 %v35, 4294901760
    %85 = vmatpush1.msra.mxu0 %v84
    %86 = vmatprep.subr.mxu0 0.0
    %v87 = vand.u32 %v36, 4294901760
    %88 = vmatpush1.msra.mxu0 %v87
    %89 = vmatprep.subr.mxu0 0.0
    %v90 = vand.u32 %v37, 4294901760
    %91 = vmatpush1.msra.mxu0 %v90
    %92 = vmatprep.subr.mxu0 0.0
    %v93 = vand.u32 %v38, 4294901760
    %94 = vmatpush1.msra.mxu0 %v93
    %95 = vmatprep.subr.mxu0 0.0
    %v96 = vand.u32 %v39, 4294901760
    %97 = vmatpush1.msra.mxu0 %v96
    %98 = vmatprep.subr.mxu0 0.0
    %v99 = vand.u32 %v40, 4294901760
    %100 = vmatpush1.msra.mxu0 %v99
    %101 = vmatprep.subr.mxu0 0.0
    %v102 = vand.u32 %v41, 4294901760
    %103 = vmatpush1.msra.mxu0 %v102
    %104 = vmatprep.subr.mxu0 0.0
    %v105 = vand.u32 %v42, 4294901760
    %106 = vmatpush1.msra.mxu0 %v105
    %107 = vmatprep.subr.mxu0 0.0
    %v108 = vand.u32 %v43, 4294901760
    %109 = vmatpush1.msra.mxu0 %v108
    %110 = vmatprep.subr.mxu0 0.0
    %v111 = vand.u32 %v44, 4294901760
    %112 = vmatpush1.msra.mxu0 %v111
    %113 = vmatprep.subr.mxu0 0.0
    %v114 = vand.u32 %v45, 4294901760
    %115 = vmatpush1.msra.mxu0 %v114
    %116 = vmatprep.subr.mxu0 0.0
    %v117 = vand.u32 %v46, 4294901760
    %118 = vmatpush1.msra.mxu0 %v117
    %119 = vmatprep.subr.mxu0 0.0
    %v120 = vand.u32 %v47, 4294901760
    %121 = vmatpush1.msra.mxu0 %v120
    %122 = vmatprep.subr.mxu0 0.0
    %v123 = vand.u32 %v48, 4294901760
    %124 = vmatpush1.msra.mxu0 %v123
    %125 = vmatprep.subr.mxu0 0.0
    %v126 = vand.u32 %v49, 4294901760
    %127 = vmatpush1.msra.mxu0 %v126
    %128 = vmatprep.subr.mxu0 0.0
    %v129 = vand.u32 %v50, 4294901760
    %130 = vmatpush1.msra.mxu0 %v129
    %131 = vmatprep.subr.mxu0 0.0
    %v132 = vand.u32 %v51, 4294901760
    %133 = vmatpush1.msra.mxu0 %v132
    %134 = vmatprep.subr.mxu0 0.0
    %v135 = vand.u32 %v52, 4294901760
    %136 = vmatpush1.msra.mxu0 %v135
    %137 = vmatprep.subr.mxu0 0.0
    %v138 = vand.u32 %v53, 4294901760
    %139 = vmatpush1.msra.mxu0 %v138
    %140 = vmatprep.subr.mxu0 0.0
    %v141 = vand.u32 %v54, 4294901760
    %142 = vmatpush1.msra.mxu0 %v141
    %143 = vmatprep.subr.mxu0 0.0
    %v144 = vand.u32 %v55, 4294901760
    %145 = vmatpush1.msra.mxu0 %v144
    %146 = vmatprep.subr.mxu0 0.0
    %v147 = vand.u32 %v56, 4294901760
    %148 = vmatpush1.msra.mxu0 %v147
    %149 = vmatprep.subr.mxu0 0.0
    %v150 = vand.u32 %v57, 4294901760
    %151 = vmatpush1.msra.mxu0 %v150
    %152 = vmatprep.subr.mxu0 0.0
    %v153 = vand.u32 %v58, 4294901760
    %154 = vmatpush1.msra.mxu0 %v153
    %v155 = vand.u32 %v26, 4294901760
    %v156 = vsub.f32 %v26, %v155
    %v157 = vand.u32 %v156, 4294901760
    %v158 = vsub.f32 %v156, %v157
    %v159 = vand.u32 %v158, 4294901760
    %160 = vmatprep.mubr.f32.mxu0 %v159
    %v161 = vand.u32 %v25, 4294901760
    %v162 = vsub.f32 %v25, %v161
    %v163 = vand.u32 %v162, 4294901760
    %v164 = vsub.f32 %v162, %v163
    %v165 = vand.u32 %v164, 4294901760
    %166 = vmatmul.mubr.f32.gmra.mrb[0].mxu0 %v165
    %v167 = vpop.f32.mrb[0].mxu0
    %v168 = vadd.f32 0.0, %v167
    %v169 = vpop.f32.mrb[0].mxu0
    %170 = vdwg.mxu0
    %171 = vmatprep.subr.mxu0 0.0
    %v172 = vand.u32 %v27, 4294901760
    %v173 = vsub.f32 %v27, %v172
    %v174 = vand.u32 %v173, 4294901760
    %v175 = vsub.f32 %v173, %v174
    %v176 = vand.u32 %v175, 4294901760
    %177 = vmatpush1.msra.mxu0 %v176
    %178 = vmatprep.subr.mxu0 0.0
    %v179 = vand.u32 %v28, 4294901760
    %v180 = vsub.f32 %v28, %v179
    %v181 = vand.u32 %v180, 4294901760
    %v182 = vsub.f32 %v180, %v181
    %v183 = vand.u32 %v182, 4294901760
    %184 = vmatpush1.msra.mxu0 %v183
    %185 = vmatprep.subr.mxu0 0.0
    %v186 = vand.u32 %v29, 4294901760
    %v187 = vsub.f32 %v29, %v186
    %v188 = vand.u32 %v187, 4294901760
    %v189 = vsub.f32 %v187, %v188
    %v190 = vand.u32 %v189, 4294901760
    %191 = vmatpush1.msra.mxu0 %v190
    %192 = vmatprep.subr.mxu0 0.0
    %v193 = vand.u32 %v30, 4294901760
    %v194 = vsub.f32 %v30, %v193
    %v195 = vand.u32 %v194, 4294901760
    %v196 = vsub.f32 %v194, %v195
    %v197 = vand.u32 %v196, 4294901760
    %198 = vmatpush1.msra.mxu0 %v197
    %199 = vmatprep.subr.mxu0 0.0
    %v200 = vand.u32 %v31, 4294901760
    %v201 = vsub.f32 %v31, %v200
    %v202 = vand.u32 %v201, 4294901760
    %v203 = vsub.f32 %v201, %v202
    %v204 = vand.u32 %v203, 4294901760
    %205 = vmatpush1.msra.mxu0 %v204
    %206 = vmatprep.subr.mxu0 0.0
    %v207 = vand.u32 %v32, 4294901760
    %v208 = vsub.f32 %v32, %v207
    %v209 = vand.u32 %v208, 4294901760
    %v210 = vsub.f32 %v208, %v209
    %v211 = vand.u32 %v210, 4294901760
    %212 = vmatpush1.msra.mxu0 %v211
    %213 = vmatprep.subr.mxu0 0.0
    %v214 = vand.u32 %v33, 4294901760
    %v215 = vsub.f32 %v33, %v214
    %v216 = vand.u32 %v215, 4294901760
    %v217 = vsub.f32 %v215, %v216
    %v218 = vand.u32 %v217, 4294901760
    %219 = vmatpush1.msra.mxu0 %v218
    %220 = vmatprep.subr.mxu0 0.0
    %v221 = vand.u32 %v34, 4294901760
    %v222 = vsub.f32 %v34, %v221
    %v223 = vand.u32 %v222, 4294901760
    %v224 = vsub.f32 %v222, %v223
    %v225 = vand.u32 %v224, 4294901760
    %226 = vmatpush1.msra.mxu0 %v225
    %227 = vmatprep.subr.mxu0 0.0
    %v228 = vand.u32 %v35, 4294901760
    %v229 = vsub.f32 %v35, %v228
    %v230 = vand.u32 %v229, 4294901760
    %v231 = vsub.f32 %v229, %v230
    %v232 = vand.u32 %v231, 4294901760
    %233 = vmatpush1.msra.mxu0 %v232
    %234 = vmatprep.subr.mxu0 0.0
    %v235 = vand.u32 %v36, 4294901760
    %v236 = vsub.f32 %v36, %v235
    %v237 = vand.u32 %v236, 4294901760
    %v238 = vsub.f32 %v236, %v237
    %v239 = vand.u32 %v238, 4294901760
    %240 = vmatpush1.msra.mxu0 %v239
    %241 = vmatprep.subr.mxu0 0.0
    %v242 = vand.u32 %v37, 4294901760
    %v243 = vsub.f32 %v37, %v242
    %v244 = vand.u32 %v243, 4294901760
    %v245 = vsub.f32 %v243, %v244
    %v246 = vand.u32 %v245, 4294901760
    %247 = vmatpush1.msra.mxu0 %v246
    %248 = vmatprep.subr.mxu0 0.0
    %v249 = vand.u32 %v38, 4294901760
    %v250 = vsub.f32 %v38, %v249
    %v251 = vand.u32 %v250, 4294901760
    %v252 = vsub.f32 %v250, %v251
    %v253 = vand.u32 %v252, 4294901760
    %254 = vmatpush1.msra.mxu0 %v253
    %255 = vmatprep.subr.mxu0 0.0
    %v256 = vand.u32 %v39, 4294901760
    %v257 = vsub.f32 %v39, %v256
    %v258 = vand.u32 %v257, 4294901760
    %v259 = vsub.f32 %v257, %v258
    %v260 = vand.u32 %v259, 4294901760
    %261 = vmatpush1.msra.mxu0 %v260
    %262 = vmatprep.subr.mxu0 0.0
    %v263 = vand.u32 %v40, 4294901760
    %v264 = vsub.f32 %v40, %v263
    %v265 = vand.u32 %v264, 4294901760
    %v266 = vsub.f32 %v264, %v265
    %v267 = vand.u32 %v266, 4294901760
    %268 = vmatpush1.msra.mxu0 %v267
    %269 = vmatprep.subr.mxu0 0.0
    %v270 = vand.u32 %v41, 4294901760
    %v271 = vsub.f32 %v41, %v270
    %v272 = vand.u32 %v271, 4294901760
    %v273 = vsub.f32 %v271, %v272
    %v274 = vand.u32 %v273, 4294901760
    %275 = vmatpush1.msra.mxu0 %v274
    %276 = vmatprep.subr.mxu0 0.0
    %v277 = vand.u32 %v42, 4294901760
    %v278 = vsub.f32 %v42, %v277
    %v279 = vand.u32 %v278, 4294901760
    %v280 = vsub.f32 %v278, %v279
    %v281 = vand.u32 %v280, 4294901760
    %282 = vmatpush1.msra.mxu0 %v281
    %283 = vmatprep.subr.mxu0 0.0
    %v284 = vand.u32 %v43, 4294901760
    %v285 = vsub.f32 %v43, %v284
    %v286 = vand.u32 %v285, 4294901760
    %v287 = vsub.f32 %v285, %v286
    %v288 = vand.u32 %v287, 4294901760
    %289 = vmatpush1.msra.mxu0 %v288
    %290 = vmatprep.subr.mxu0 0.0
    %v291 = vand.u32 %v44, 4294901760
    %v292 = vsub.f32 %v44, %v291
    %v293 = vand.u32 %v292, 4294901760
    %v294 = vsub.f32 %v292, %v293
    %v295 = vand.u32 %v294, 4294901760
    %296 = vmatpush1.msra.mxu0 %v295
    %297 = vmatprep.subr.mxu0 0.0
    %v298 = vand.u32 %v45, 4294901760
    %v299 = vsub.f32 %v45, %v298
    %v300 = vand.u32 %v299, 4294901760
    %v301 = vsub.f32 %v299, %v300
    %v302 = vand.u32 %v301, 4294901760
    %303 = vmatpush1.msra.mxu0 %v302
    %304 = vmatprep.subr.mxu0 0.0
    %v305 = vand.u32 %v46, 4294901760
    %v306 = vsub.f32 %v46, %v305
    %v307 = vand.u32 %v306, 4294901760
    %v308 = vsub.f32 %v306, %v307
    %v309 = vand.u32 %v308, 4294901760
    %310 = vmatpush1.msra.mxu0 %v309
    %311 = vmatprep.subr.mxu0 0.0
    %v312 = vand.u32 %v47, 4294901760
    %v313 = vsub.f32 %v47, %v312
    %v314 = vand.u32 %v313, 4294901760
    %v315 = vsub.f32 %v313, %v314
    %v316 = vand.u32 %v315, 4294901760
    %317 = vmatpush1.msra.mxu0 %v316
    %318 = vmatprep.subr.mxu0 0.0
    %v319 = vand.u32 %v48, 4294901760
    %v320 = vsub.f32 %v48, %v319
    %v321 = vand.u32 %v320, 4294901760
    %v322 = vsub.f32 %v320, %v321
    %v323 = vand.u32 %v322, 4294901760
    %324 = vmatpush1.msra.mxu0 %v323
    %325 = vmatprep.subr.mxu0 0.0
    %v326 = vand.u32 %v49, 4294901760
    %v327 = vsub.f32 %v49, %v326
    %v328 = vand.u32 %v327, 4294901760
    %v329 = vsub.f32 %v327, %v328
    %v330 = vand.u32 %v329, 4294901760
    %331 = vmatpush1.msra.mxu0 %v330
    %332 = vmatprep.subr.mxu0 0.0
    %v333 = vand.u32 %v50, 4294901760
    %v334 = vsub.f32 %v50, %v333
    %v335 = vand.u32 %v334, 4294901760
    %v336 = vsub.f32 %v334, %v335
    %v337 = vand.u32 %v336, 4294901760
    %338 = vmatpush1.msra.mxu0 %v337
    %339 = vmatprep.subr.mxu0 0.0
    %v340 = vand.u32 %v51, 4294901760
    %v341 = vsub.f32 %v51, %v340
    %v342 = vand.u32 %v341, 4294901760
    %v343 = vsub.f32 %v341, %v342
    %v344 = vand.u32 %v343, 4294901760
    %345 = vmatpush1.msra.mxu0 %v344
    %346 = vmatprep.subr.mxu0 0.0
    %v347 = vand.u32 %v52, 4294901760
    %v348 = vsub.f32 %v52, %v347
    %v349 = vand.u32 %v348, 4294901760
    %v350 = vsub.f32 %v348, %v349
    %v351 = vand.u32 %v350, 4294901760
    %352 = vmatpush1.msra.mxu0 %v351
    %353 = vmatprep.subr.mxu0 0.0
    %v354 = vand.u32 %v53, 4294901760
    %v355 = vsub.f32 %v53, %v354
    %v356 = vand.u32 %v355, 4294901760
    %v357 = vsub.f32 %v355, %v356
    %v358 = vand.u32 %v357, 4294901760
    %359 = vmatpush1.msra.mxu0 %v358
    %360 = vmatprep.subr.mxu0 0.0
    %v361 = vand.u32 %v54, 4294901760
    %v362 = vsub.f32 %v54, %v361
    %v363 = vand.u32 %v362, 4294901760
    %v364 = vsub.f32 %v362, %v363
    %v365 = vand.u32 %v364, 4294901760
    %366 = vmatpush1.msra.mxu0 %v365
    %367 = vmatprep.subr.mxu0 0.0
    %v368 = vand.u32 %v55, 4294901760
    %v369 = vsub.f32 %v55, %v368
    %v370 = vand.u32 %v369, 4294901760
    %v371 = vsub.f32 %v369, %v370
    %v372 = vand.u32 %v371, 4294901760
    %373 = vmatpush1.msra.mxu0 %v372
    %374 = vmatprep.subr.mxu0 0.0
    %v375 = vand.u32 %v56, 4294901760
    %v376 = vsub.f32 %v56, %v375
    %v377 = vand.u32 %v376, 4294901760
    %v378 = vsub.f32 %v376, %v377
    %v379 = vand.u32 %v378, 4294901760
    %380 = vmatpush1.msra.mxu0 %v379
    %381 = vmatprep.subr.mxu0 0.0
    %v382 = vand.u32 %v57, 4294901760
    %v383 = vsub.f32 %v57, %v382
    %v384 = vand.u32 %v383, 4294901760
    %v385 = vsub.f32 %v383, %v384
    %v386 = vand.u32 %v385, 4294901760
    %387 = vmatpush1.msra.mxu0 %v386
    %388 = vmatprep.subr.mxu0 0.0
    %v389 = vand.u32 %v58, 4294901760
    %v390 = vsub.f32 %v58, %v389
    %v391 = vand.u32 %v390, 4294901760
    %v392 = vsub.f32 %v390, %v391
    %v393 = vand.u32 %v392, 4294901760
    %394 = vmatpush1.msra.mxu0 %v393
    %v395 = vand.u32 %v26, 4294901760
    %396 = vmatprep.mubr.f32.mxu0 %v395
    %v397 = vand.u32 %v25, 4294901760
    %398 = vmatmul.mubr.f32.gmra.mrb[0].mxu0 %v397
    %v399 = vpop.f32.mrb[0].mxu0
    %v400 = vadd.f32 %v168, %v399
    %v401 = vpop.f32.mrb[0].mxu0
    %402 = vdwg.mxu0
    %403 = vmatprep.subr.mxu0 0.0
    %v404 = vand.u32 %v27, 4294901760
    %v405 = vsub.f32 %v27, %v404
    %406 = vmatpush1.msra.mxu0 %v405
    %407 = vmatprep.subr.mxu0 0.0
    %v408 = vand.u32 %v28, 4294901760
    %v409 = vsub.f32 %v28, %v408
    %410 = vmatpush1.msra.mxu0 %v409
    %411 = vmatprep.subr.mxu0 0.0
    %v412 = vand.u32 %v29, 4294901760
    %v413 = vsub.f32 %v29, %v412
    %414 = vmatpush1.msra.mxu0 %v413
    %415 = vmatprep.subr.mxu0 0.0
    %v416 = vand.u32 %v30, 4294901760
    %v417 = vsub.f32 %v30, %v416
    %418 = vmatpush1.msra.mxu0 %v417
    %419 = vmatprep.subr.mxu0 0.0
    %v420 = vand.u32 %v31, 4294901760
    %v421 = vsub.f32 %v31, %v420
    %422 = vmatpush1.msra.mxu0 %v421
    %423 = vmatprep.subr.mxu0 0.0
    %v424 = vand.u32 %v32, 4294901760
    %v425 = vsub.f32 %v32, %v424
    %426 = vmatpush1.msra.mxu0 %v425
    %427 = vmatprep.subr.mxu0 0.0
    %v428 = vand.u32 %v33, 4294901760
    %v429 = vsub.f32 %v33, %v428
    %430 = vmatpush1.msra.mxu0 %v429
    %431 = vmatprep.subr.mxu0 0.0
    %v432 = vand.u32 %v34, 4294901760
    %v433 = vsub.f32 %v34, %v432
    %434 = vmatpush1.msra.mxu0 %v433
    %435 = vmatprep.subr.mxu0 0.0
    %v436 = vand.u32 %v35, 4294901760
    %v437 = vsub.f32 %v35, %v436
    %438 = vmatpush1.msra.mxu0 %v437
    %439 = vmatprep.subr.mxu0 0.0
    %v440 = vand.u32 %v36, 4294901760
    %v441 = vsub.f32 %v36, %v440
    %442 = vmatpush1.msra.mxu0 %v441
    %443 = vmatprep.subr.mxu0 0.0
    %v444 = vand.u32 %v37, 4294901760
    %v445 = vsub.f32 %v37, %v444
    %446 = vmatpush1.msra.mxu0 %v445
    %447 = vmatprep.subr.mxu0 0.0
    %v448 = vand.u32 %v38, 4294901760
    %v449 = vsub.f32 %v38, %v448
    %450 = vmatpush1.msra.mxu0 %v449
    %451 = vmatprep.subr.mxu0 0.0
    %v452 = vand.u32 %v39, 4294901760
    %v453 = vsub.f32 %v39, %v452
    %454 = vmatpush1.msra.mxu0 %v453
    %455 = vmatprep.subr.mxu0 0.0
    %v456 = vand.u32 %v40, 4294901760
    %v457 = vsub.f32 %v40, %v456
    %458 = vmatpush1.msra.mxu0 %v457
    %459 = vmatprep.subr.mxu0 0.0
    %v460 = vand.u32 %v41, 4294901760
    %v461 = vsub.f32 %v41, %v460
    %462 = vmatpush1.msra.mxu0 %v461
    %463 = vmatprep.subr.mxu0 0.0
    %v464 = vand.u32 %v42, 4294901760
    %v465 = vsub.f32 %v42, %v464
    %466 = vmatpush1.msra.mxu0 %v465
    %467 = vmatprep.subr.mxu0 0.0
    %v468 = vand.u32 %v43, 4294901760
    %v469 = vsub.f32 %v43, %v468
    %470 = vmatpush1.msra.mxu0 %v469
    %471 = vmatprep.subr.mxu0 0.0
    %v472 = vand.u32 %v44, 4294901760
    %v473 = vsub.f32 %v44, %v472
    %474 = vmatpush1.msra.mxu0 %v473
    %475 = vmatprep.subr.mxu0 0.0
    %v476 = vand.u32 %v45, 4294901760
    %v477 = vsub.f32 %v45, %v476
    %478 = vmatpush1.msra.mxu0 %v477
    %479 = vmatprep.subr.mxu0 0.0
    %v480 = vand.u32 %v46, 4294901760
    %v481 = vsub.f32 %v46, %v480
    %482 = vmatpush1.msra.mxu0 %v481
    %483 = vmatprep.subr.mxu0 0.0
    %v484 = vand.u32 %v47, 4294901760
    %v485 = vsub.f32 %v47, %v484
    %486 = vmatpush1.msra.mxu0 %v485
    %487 = vmatprep.subr.mxu0 0.0
    %v488 = vand.u32 %v48, 4294901760
    %v489 = vsub.f32 %v48, %v488
    %490 = vmatpush1.msra.mxu0 %v489
    %491 = vmatprep.subr.mxu0 0.0
    %v492 = vand.u32 %v49, 4294901760
    %v493 = vsub.f32 %v49, %v492
    %494 = vmatpush1.msra.mxu0 %v493
    %495 = vmatprep.subr.mxu0 0.0
    %v496 = vand.u32 %v50, 4294901760
    %v497 = vsub.f32 %v50, %v496
    %498 = vmatpush1.msra.mxu0 %v497
    %499 = vmatprep.subr.mxu0 0.0
    %v500 = vand.u32 %v51, 4294901760
    %v501 = vsub.f32 %v51, %v500
    %502 = vmatpush1.msra.mxu0 %v501
    %503 = vmatprep.subr.mxu0 0.0
    %v504 = vand.u32 %v52, 4294901760
    %v505 = vsub.f32 %v52, %v504
    %506 = vmatpush1.msra.mxu0 %v505
    %507 = vmatprep.subr.mxu0 0.0
    %v508 = vand.u32 %v53, 4294901760
    %v509 = vsub.f32 %v53, %v508
    %510 = vmatpush1.msra.mxu0 %v509
    %511 = vmatprep.subr.mxu0 0.0
    %v512 = vand.u32 %v54, 4294901760
    %v513 = vsub.f32 %v54, %v512
    %514 = vmatpush1.msra.mxu0 %v513
    %515 = vmatprep.subr.mxu0 0.0
    %v516 = vand.u32 %v55, 4294901760
    %v517 = vsub.f32 %v55, %v516
    %518 = vmatpush1.msra.mxu0 %v517
    %519 = vmatprep.subr.mxu0 0.0
    %v520 = vand.u32 %v56, 4294901760
    %v521 = vsub.f32 %v56, %v520
    %522 = vmatpush1.msra.mxu0 %v521
    %523 = vmatprep.subr.mxu0 0.0
    %v524 = vand.u32 %v57, 4294901760
    %v525 = vsub.f32 %v57, %v524
    %526 = vmatpush1.msra.mxu0 %v525
    %527 = vmatprep.subr.mxu0 0.0
    %v528 = vand.u32 %v58, 4294901760
    %v529 = vsub.f32 %v58, %v528
    %530 = vmatpush1.msra.mxu0 %v529
    %v531 = vand.u32 %v26, 4294901760
    %v532 = vsub.f32 %v26, %v531
    %533 = vmatprep.mubr.f32.mxu0 %v532
    %v534 = vand.u32 %v25, 4294901760
    %v535 = vsub.f32 %v25, %v534
    %536 = vmatmul.mubr.f32.gmra.mrb[0].mxu0 %v535
    %v537 = vpop.f32.mrb[0].mxu0
    %v538 = vadd.f32 %v400, %v537
    %v539 = vpop.f32.mrb[0].mxu0
    %540 = vdwg.mxu0
    %541 = vmatprep.subr.mxu0 0.0
    %v542 = vand.u32 %v27, 4294901760
    %543 = vmatpush1.msra.mxu0 %v542
    %544 = vmatprep.subr.mxu0 0.0
    %v545 = vand.u32 %v28, 4294901760
    %546 = vmatpush1.msra.mxu0 %v545
    %547 = vmatprep.subr.mxu0 0.0
    %v548 = vand.u32 %v29, 4294901760
    %549 = vmatpush1.msra.mxu0 %v548
    %550 = vmatprep.subr.mxu0 0.0
    %v551 = vand.u32 %v30, 4294901760
    %552 = vmatpush1.msra.mxu0 %v551
    %553 = vmatprep.subr.mxu0 0.0
    %v554 = vand.u32 %v31, 4294901760
    %555 = vmatpush1.msra.mxu0 %v554
    %556 = vmatprep.subr.mxu0 0.0
    %v557 = vand.u32 %v32, 4294901760
    %558 = vmatpush1.msra.mxu0 %v557
    %559 = vmatprep.subr.mxu0 0.0
    %v560 = vand.u32 %v33, 4294901760
    %561 = vmatpush1.msra.mxu0 %v560
    %562 = vmatprep.subr.mxu0 0.0
    %v563 = vand.u32 %v34, 4294901760
    %564 = vmatpush1.msra.mxu0 %v563
    %565 = vmatprep.subr.mxu0 0.0
    %v566 = vand.u32 %v35, 4294901760
    %567 = vmatpush1.msra.mxu0 %v566
    %568 = vmatprep.subr.mxu0 0.0
    %v569 = vand.u32 %v36, 4294901760
    %570 = vmatpush1.msra.mxu0 %v569
    %571 = vmatprep.subr.mxu0 0.0
    %v572 = vand.u32 %v37, 4294901760
    %573 = vmatpush1.msra.mxu0 %v572
    %574 = vmatprep.subr.mxu0 0.0
    %v575 = vand.u32 %v38, 4294901760
    %576 = vmatpush1.msra.mxu0 %v575
    %577 = vmatprep.subr.mxu0 0.0
    %v578 = vand.u32 %v39, 4294901760
    %579 = vmatpush1.msra.mxu0 %v578
    %580 = vmatprep.subr.mxu0 0.0
    %v581 = vand.u32 %v40, 4294901760
    %582 = vmatpush1.msra.mxu0 %v581
    %583 = vmatprep.subr.mxu0 0.0
    %v584 = vand.u32 %v41, 4294901760
    %585 = vmatpush1.msra.mxu0 %v584
    %586 = vmatprep.subr.mxu0 0.0
    %v587 = vand.u32 %v42, 4294901760
    %588 = vmatpush1.msra.mxu0 %v587
    %589 = vmatprep.subr.mxu0 0.0
    %v590 = vand.u32 %v43, 4294901760
    %591 = vmatpush1.msra.mxu0 %v590
    %592 = vmatprep.subr.mxu0 0.0
    %v593 = vand.u32 %v44, 4294901760
    %594 = vmatpush1.msra.mxu0 %v593
    %595 = vmatprep.subr.mxu0 0.0
    %v596 = vand.u32 %v45, 4294901760
    %597 = vmatpush1.msra.mxu0 %v596
    %598 = vmatprep.subr.mxu0 0.0
    %v599 = vand.u32 %v46, 4294901760
    %600 = vmatpush1.msra.mxu0 %v599
    %601 = vmatprep.subr.mxu0 0.0
    %v602 = vand.u32 %v47, 4294901760
    %603 = vmatpush1.msra.mxu0 %v602
    %604 = vmatprep.subr.mxu0 0.0
    %v605 = vand.u32 %v48, 4294901760
    %606 = vmatpush1.msra.mxu0 %v605
    %607 = vmatprep.subr.mxu0 0.0
    %v608 = vand.u32 %v49, 4294901760
    %609 = vmatpush1.msra.mxu0 %v608
    %610 = vmatprep.subr.mxu0 0.0
    %v611 = vand.u32 %v50, 4294901760
    %612 = vmatpush1.msra.mxu0 %v611
    %613 = vmatprep.subr.mxu0 0.0
    %v614 = vand.u32 %v51, 4294901760
    %615 = vmatpush1.msra.mxu0 %v614
    %616 = vmatprep.subr.mxu0 0.0
    %v617 = vand.u32 %v52, 4294901760
    %618 = vmatpush1.msra.mxu0 %v617
    %619 = vmatprep.subr.mxu0 0.0
    %v620 = vand.u32 %v53, 4294901760
    %621 = vmatpush1.msra.mxu0 %v620
    %622 = vmatprep.subr.mxu0 0.0
    %v623 = vand.u32 %v54, 4294901760
    %624 = vmatpush1.msra.mxu0 %v623
    %625 = vmatprep.subr.mxu0 0.0
    %v626 = vand.u32 %v55, 4294901760
    %627 = vmatpush1.msra.mxu0 %v626
    %628 = vmatprep.subr.mxu0 0.0
    %v629 = vand.u32 %v56, 4294901760
    %630 = vmatpush1.msra.mxu0 %v629
    %631 = vmatprep.subr.mxu0 0.0
    %v632 = vand.u32 %v57, 4294901760
    %633 = vmatpush1.msra.mxu0 %v632
    %634 = vmatprep.subr.mxu0 0.0
    %v635 = vand.u32 %v58, 4294901760
    %636 = vmatpush1.msra.mxu0 %v635
    %v637 = vand.u32 %v26, 4294901760
    %v638 = vsub.f32 %v26, %v637
    %v639 = vand.u32 %v638, 4294901760
    %640 = vmatprep.mubr.f32.mxu0 %v639
    %v641 = vand.u32 %v25, 4294901760
    %v642 = vsub.f32 %v25, %v641
    %v643 = vand.u32 %v642, 4294901760
    %644 = vmatmul.mubr.f32.gmra.mrb[0].mxu0 %v643
    %v645 = vpop.f32.mrb[0].mxu0
    %v646 = vadd.f32 %v538, %v645
    %v647 = vpop.f32.mrb[0].mxu0
    %648 = vdwg.mxu0
    %649 = vmatprep.subr.mxu0 0.0
    %v650 = vand.u32 %v27, 4294901760
    %v651 = vsub.f32 %v27, %v650
    %v652 = vand.u32 %v651, 4294901760
    %653 = vmatpush1.msra.mxu0 %v652
    %654 = vmatprep.subr.mxu0 0.0
    %v655 = vand.u32 %v28, 4294901760
    %v656 = vsub.f32 %v28, %v655
    %v657 = vand.u32 %v656, 4294901760
    %658 = vmatpush1.msra.mxu0 %v657
    %659 = vmatprep.subr.mxu0 0.0
    %v660 = vand.u32 %v29, 4294901760
    %v661 = vsub.f32 %v29, %v660
    %v662 = vand.u32 %v661, 4294901760
    %663 = vmatpush1.msra.mxu0 %v662
    %664 = vmatprep.subr.mxu0 0.0
    %v665 = vand.u32 %v30, 4294901760
    %v666 = vsub.f32 %v30, %v665
    %v667 = vand.u32 %v666, 4294901760
    %668 = vmatpush1.msra.mxu0 %v667
    %669 = vmatprep.subr.mxu0 0.0
    %v670 = vand.u32 %v31, 4294901760
    %v671 = vsub.f32 %v31, %v670
    %v672 = vand.u32 %v671, 4294901760
    %673 = vmatpush1.msra.mxu0 %v672
    %674 = vmatprep.subr.mxu0 0.0
    %v675 = vand.u32 %v32, 4294901760
    %v676 = vsub.f32 %v32, %v675
    %v677 = vand.u32 %v676, 4294901760
    %678 = vmatpush1.msra.mxu0 %v677
    %679 = vmatprep.subr.mxu0 0.0
    %v680 = vand.u32 %v33, 4294901760
    %v681 = vsub.f32 %v33, %v680
    %v682 = vand.u32 %v681, 4294901760
    %683 = vmatpush1.msra.mxu0 %v682
    %684 = vmatprep.subr.mxu0 0.0
    %v685 = vand.u32 %v34, 4294901760
    %v686 = vsub.f32 %v34, %v685
    %v687 = vand.u32 %v686, 4294901760
    %688 = vmatpush1.msra.mxu0 %v687
    %689 = vmatprep.subr.mxu0 0.0
    %v690 = vand.u32 %v35, 4294901760
    %v691 = vsub.f32 %v35, %v690
    %v692 = vand.u32 %v691, 4294901760
    %693 = vmatpush1.msra.mxu0 %v692
    %694 = vmatprep.subr.mxu0 0.0
    %v695 = vand.u32 %v36, 4294901760
    %v696 = vsub.f32 %v36, %v695
    %v697 = vand.u32 %v696, 4294901760
    %698 = vmatpush1.msra.mxu0 %v697
    %699 = vmatprep.subr.mxu0 0.0
    %v700 = vand.u32 %v37, 4294901760
    %v701 = vsub.f32 %v37, %v700
    %v702 = vand.u32 %v701, 4294901760
    %703 = vmatpush1.msra.mxu0 %v702
    %704 = vmatprep.subr.mxu0 0.0
    %v705 = vand.u32 %v38, 4294901760
    %v706 = vsub.f32 %v38, %v705
    %v707 = vand.u32 %v706, 4294901760
    %708 = vmatpush1.msra.mxu0 %v707
    %709 = vmatprep.subr.mxu0 0.0
    %v710 = vand.u32 %v39, 4294901760
    %v711 = vsub.f32 %v39, %v710
    %v712 = vand.u32 %v711, 4294901760
    %713 = vmatpush1.msra.mxu0 %v712
    %714 = vmatprep.subr.mxu0 0.0
    %v715 = vand.u32 %v40, 4294901760
    %v716 = vsub.f32 %v40, %v715
    %v717 = vand.u32 %v716, 4294901760
    %718 = vmatpush1.msra.mxu0 %v717
    %719 = vmatprep.subr.mxu0 0.0
    %v720 = vand.u32 %v41, 4294901760
    %v721 = vsub.f32 %v41, %v720
    %v722 = vand.u32 %v721, 4294901760
    %723 = vmatpush1.msra.mxu0 %v722
    %724 = vmatprep.subr.mxu0 0.0
    %v725 = vand.u32 %v42, 4294901760
    %v726 = vsub.f32 %v42, %v725
    %v727 = vand.u32 %v726, 4294901760
    %728 = vmatpush1.msra.mxu0 %v727
    %729 = vmatprep.subr.mxu0 0.0
    %v730 = vand.u32 %v43, 4294901760
    %v731 = vsub.f32 %v43, %v730
    %v732 = vand.u32 %v731, 4294901760
    %733 = vmatpush1.msra.mxu0 %v732
    %734 = vmatprep.subr.mxu0 0.0
    %v735 = vand.u32 %v44, 4294901760
    %v736 = vsub.f32 %v44, %v735
    %v737 = vand.u32 %v736, 4294901760
    %738 = vmatpush1.msra.mxu0 %v737
    %739 = vmatprep.subr.mxu0 0.0
    %v740 = vand.u32 %v45, 4294901760
    %v741 = vsub.f32 %v45, %v740
    %v742 = vand.u32 %v741, 4294901760
    %743 = vmatpush1.msra.mxu0 %v742
    %744 = vmatprep.subr.mxu0 0.0
    %v745 = vand.u32 %v46, 4294901760
    %v746 = vsub.f32 %v46, %v745
    %v747 = vand.u32 %v746, 4294901760
    %748 = vmatpush1.msra.mxu0 %v747
    %749 = vmatprep.subr.mxu0 0.0
    %v750 = vand.u32 %v47, 4294901760
    %v751 = vsub.f32 %v47, %v750
    %v752 = vand.u32 %v751, 4294901760
    %753 = vmatpush1.msra.mxu0 %v752
    %754 = vmatprep.subr.mxu0 0.0
    %v755 = vand.u32 %v48, 4294901760
    %v756 = vsub.f32 %v48, %v755
    %v757 = vand.u32 %v756, 4294901760
    %758 = vmatpush1.msra.mxu0 %v757
    %759 = vmatprep.subr.mxu0 0.0
    %v760 = vand.u32 %v49, 4294901760
    %v761 = vsub.f32 %v49, %v760
    %v762 = vand.u32 %v761, 4294901760
    %763 = vmatpush1.msra.mxu0 %v762
    %764 = vmatprep.subr.mxu0 0.0
    %v765 = vand.u32 %v50, 4294901760
    %v766 = vsub.f32 %v50, %v765
    %v767 = vand.u32 %v766, 4294901760
    %768 = vmatpush1.msra.mxu0 %v767
    %769 = vmatprep.subr.mxu0 0.0
    %v770 = vand.u32 %v51, 4294901760
    %v771 = vsub.f32 %v51, %v770
    %v772 = vand.u32 %v771, 4294901760
    %773 = vmatpush1.msra.mxu0 %v772
    %774 = vmatprep.subr.mxu0 0.0
    %v775 = vand.u32 %v52, 4294901760
    %v776 = vsub.f32 %v52, %v775
    %v777 = vand.u32 %v776, 4294901760
    %778 = vmatpush1.msra.mxu0 %v777
    %779 = vmatprep.subr.mxu0 0.0
    %v780 = vand.u32 %v53, 4294901760
    %v781 = vsub.f32 %v53, %v780
    %v782 = vand.u32 %v781, 4294901760
    %783 = vmatpush1.msra.mxu0 %v782
    %784 = vmatprep.subr.mxu0 0.0
    %v785 = vand.u32 %v54, 4294901760
    %v786 = vsub.f32 %v54, %v785
    %v787 = vand.u32 %v786, 4294901760
    %788 = vmatpush1.msra.mxu0 %v787
    %789 = vmatprep.subr.mxu0 0.0
    %v790 = vand.u32 %v55, 4294901760
    %v791 = vsub.f32 %v55, %v790
    %v792 = vand.u32 %v791, 4294901760
    %793 = vmatpush1.msra.mxu0 %v792
    %794 = vmatprep.subr.mxu0 0.0
    %v795 = vand.u32 %v56, 4294901760
    %v796 = vsub.f32 %v56, %v795
    %v797 = vand.u32 %v796, 4294901760
    %798 = vmatpush1.msra.mxu0 %v797
    %799 = vmatprep.subr.mxu0 0.0
    %v800 = vand.u32 %v57, 4294901760
    %v801 = vsub.f32 %v57, %v800
    %v802 = vand.u32 %v801, 4294901760
    %803 = vmatpush1.msra.mxu0 %v802
    %804 = vmatprep.subr.mxu0 0.0
    %v805 = vand.u32 %v58, 4294901760
    %v806 = vsub.f32 %v58, %v805
    %v807 = vand.u32 %v806, 4294901760
    %808 = vmatpush1.msra.mxu0 %v807
    %v809 = vand.u32 %v26, 4294901760
    %810 = vmatprep.mubr.f32.mxu0 %v809
    %v811 = vand.u32 %v25, 4294901760
    %812 = vmatmul.mubr.f32.gmra.mrb[0].mxu0 %v811
    %v813 = vpop.f32.mrb[0].mxu0
    %v814 = vadd.f32 %v646, %v813
    %v815 = vpop.f32.mrb[0].mxu0
    %816 = vdwg.mxu0
    %817 = vmatprep.subr.mxu0 0.0
    %v818 = vand.u32 %v27, 4294901760
    %819 = vmatpush1.msra.mxu0 %v818
    %820 = vmatprep.subr.mxu0 0.0
    %v821 = vand.u32 %v28, 4294901760
    %822 = vmatpush1.msra.mxu0 %v821
    %823 = vmatprep.subr.mxu0 0.0
    %v824 = vand.u32 %v29, 4294901760
    %825 = vmatpush1.msra.mxu0 %v824
    %826 = vmatprep.subr.mxu0 0.0
    %v827 = vand.u32 %v30, 4294901760
    %828 = vmatpush1.msra.mxu0 %v827
    %829 = vmatprep.subr.mxu0 0.0
    %v830 = vand.u32 %v31, 4294901760
    %831 = vmatpush1.msra.mxu0 %v830
    %832 = vmatprep.subr.mxu0 0.0
    %v833 = vand.u32 %v32, 4294901760
    %834 = vmatpush1.msra.mxu0 %v833
    %835 = vmatprep.subr.mxu0 0.0
    %v836 = vand.u32 %v33, 4294901760
    %837 = vmatpush1.msra.mxu0 %v836
    %838 = vmatprep.subr.mxu0 0.0
    %v839 = vand.u32 %v34, 4294901760
    %840 = vmatpush1.msra.mxu0 %v839
    %841 = vmatprep.subr.mxu0 0.0
    %v842 = vand.u32 %v35, 4294901760
    %843 = vmatpush1.msra.mxu0 %v842
    %844 = vmatprep.subr.mxu0 0.0
    %v845 = vand.u32 %v36, 4294901760
    %846 = vmatpush1.msra.mxu0 %v845
    %847 = vmatprep.subr.mxu0 0.0
    %v848 = vand.u32 %v37, 4294901760
    %849 = vmatpush1.msra.mxu0 %v848
    %850 = vmatprep.subr.mxu0 0.0
    %v851 = vand.u32 %v38, 4294901760
    %852 = vmatpush1.msra.mxu0 %v851
    %853 = vmatprep.subr.mxu0 0.0
    %v854 = vand.u32 %v39, 4294901760
    %855 = vmatpush1.msra.mxu0 %v854
    %856 = vmatprep.subr.mxu0 0.0
    %v857 = vand.u32 %v40, 4294901760
    %858 = vmatpush1.msra.mxu0 %v857
    %859 = vmatprep.subr.mxu0 0.0
    %v860 = vand.u32 %v41, 4294901760
    %861 = vmatpush1.msra.mxu0 %v860
    %862 = vmatprep.subr.mxu0 0.0
    %v863 = vand.u32 %v42, 4294901760
    %864 = vmatpush1.msra.mxu0 %v863
    %865 = vmatprep.subr.mxu0 0.0
    %v866 = vand.u32 %v43, 4294901760
    %867 = vmatpush1.msra.mxu0 %v866
    %868 = vmatprep.subr.mxu0 0.0
    %v869 = vand.u32 %v44, 4294901760
    %870 = vmatpush1.msra.mxu0 %v869
    %871 = vmatprep.subr.mxu0 0.0
    %v872 = vand.u32 %v45, 4294901760
    %873 = vmatpush1.msra.mxu0 %v872
    %874 = vmatprep.subr.mxu0 0.0
    %v875 = vand.u32 %v46, 4294901760
    %876 = vmatpush1.msra.mxu0 %v875
    %877 = vmatprep.subr.mxu0 0.0
    %v878 = vand.u32 %v47, 4294901760
    %879 = vmatpush1.msra.mxu0 %v878
    %880 = vmatprep.subr.mxu0 0.0
    %v881 = vand.u32 %v48, 4294901760
    %882 = vmatpush1.msra.mxu0 %v881
    %883 = vmatprep.subr.mxu0 0.0
    %v884 = vand.u32 %v49, 4294901760
    %885 = vmatpush1.msra.mxu0 %v884
    %886 = vmatprep.subr.mxu0 0.0
    %v887 = vand.u32 %v50, 4294901760
    %888 = vmatpush1.msra.mxu0 %v887
    %889 = vmatprep.subr.mxu0 0.0
    %v890 = vand.u32 %v51, 4294901760
    %891 = vmatpush1.msra.mxu0 %v890
    %892 = vmatprep.subr.mxu0 0.0
    %v893 = vand.u32 %v52, 4294901760
    %894 = vmatpush1.msra.mxu0 %v893
    %895 = vmatprep.subr.mxu0 0.0
    %v896 = vand.u32 %v53, 4294901760
    %897 = vmatpush1.msra.mxu0 %v896
    %898 = vmatprep.subr.mxu0 0.0
    %v899 = vand.u32 %v54, 4294901760
    %900 = vmatpush1.msra.mxu0 %v899
    %901 = vmatprep.subr.mxu0 0.0
    %v902 = vand.u32 %v55, 4294901760
    %903 = vmatpush1.msra.mxu0 %v902
    %904 = vmatprep.subr.mxu0 0.0
    %v905 = vand.u32 %v56, 4294901760
    %906 = vmatpush1.msra.mxu0 %v905
    %907 = vmatprep.subr.mxu0 0.0
    %v908 = vand.u32 %v57, 4294901760
    %909 = vmatpush1.msra.mxu0 %v908
    %910 = vmatprep.subr.mxu0 0.0
    %v911 = vand.u32 %v58, 4294901760
    %912 = vmatpush1.msra.mxu0 %v911
    %v913 = vand.u32 %v26, 4294901760
    %914 = vmatprep.mubr.f32.mxu0 %v913
    %v915 = vand.u32 %v25, 4294901760
    %916 = vmatmul.mubr.f32.gmra.mrb[0].mxu0 %v915
    %v917 = vpop.f32.mrb[0].mxu0
    %v918 = vadd.f32 %v814, %v917
    %v919 = vpop.f32.mrb[0].mxu0
    %920 = vdwg.mxu0
    %vm921 = vcmask 261120
    %922 = vst.msk [vmem:[#allocation2] sm:$0xff] %vm921, %v918
    // Predicated region
    $region10: #{tpu_custom_call.1} parent=1 // pred_check
      _
    $region11: #{tpu_custom_call.1} parent=1 // pred_check_branch
      %924 = sbr.rel (0) target = $region13
    $region12: #{tpu_custom_call.1} parent=1 // pred_region
      %s926 = ssub.s32 128, 128
      %927 = vsyncadd [#allocation3], %s926
      %s929 = sshll.u32 [#allocation2], 4
      %s930 = int_to_ptr.vmem [resolvable:$true] %s929
      %932 = dma.vmem_to_hbm [thread:$0]  %s930, 128, %s2, [#allocation3]
    $region13: #{tpu_custom_call.1} parent=1 // pred_fallthru
      _
    // Predicated region
    $region14: #{tpu_custom_call.1} parent=1 // pred_check
      _
    $region15: #{tpu_custom_call.1} parent=1 // pred_check_branch
      %934 = sbr.rel (0) target = $region17
    $region16: #{tpu_custom_call.1} parent=1 // pred_region
      %935 = dma.done [#allocation3], 128
    $region17: #{tpu_custom_call.1} parent=1 // pred_fallthru
      _
    %936 = vsyncpa [#allocation3], 1

</llo_original>
